<compile_context>
chip_gen: v5e
topology: v5e:2x2
jax: 0.10.0
libtpu: 0.0.40
codegen_flags: <defaults>
</compile_context>

<pallas_src>
import functools

import jax
import jax.numpy as jnp
from jax.experimental import pallas as pl
from jax.experimental.pallas import tpu as pltpu

LRELU_SLOPE = 0.1


def _leaky_relu(v):
    return jnp.where(v >= 0, v, LRELU_SLOPE * v)


def resblock2_kernel(x_ref, mask_ref, w1_ref, b1_ref, w2_ref, b2_ref,
                     o_ref, pad_ref, *, dilations, kernel_size, pad_max):
    """One batch element per grid step.

    x_ref   : (1, C, T)          activation tile
    mask_ref: (1, 1, T)          sequence mask
    w*_ref  : (C, K*C)           conv weight, taps flattened into the reduce dim
    b*_ref  : (C, 1)             conv bias (f32)
    o_ref   : (1, C, T)          output tile
    pad_ref : (C, T + 2*pad_max) zero-padded VMEM scratch (compute dtype)
    """
    C = x_ref.shape[1]
    T = x_ref.shape[2]
    cdt = pad_ref.dtype                               # matmul / scratch dtype (bf16)

    # Residual carried in f32; mask broadcast hoisted out of the layer loop.
    x = x_ref[0].astype(jnp.float32)                  # (C, T)
    mask = jnp.broadcast_to(mask_ref[0].astype(jnp.float32), (C, T))

    # Zero the whole padded scratch once per grid step.  Only the centre
    # [pad_max : pad_max + T] is ever written afterwards, so the halo columns
    # stay zero for both layers (this is the conv 'same' zero padding).
    pad_ref[...] = jnp.zeros_like(pad_ref)

    layers = ((w1_ref, b1_ref, dilations[0]),
              (w2_ref, b2_ref, dilations[1]))
    for w_ref, b_ref, d in layers:
        pad = d * (kernel_size - 1) // 2

        # leaky_relu + mask in f32 on the VPU.
        xt = _leaky_relu(x) * mask                    # (C, T) f32

        # One centre write into the padded scratch (cast to compute dtype).
        pad_ref[:, pad_max:pad_max + T] = xt.astype(cdt)

        # K shifted static views stacked along the reduce dim -> (K*C, T),
        # then a single MXU matmul with reduce dim K*C (f32 accumulation).
        slab = jnp.concatenate(
            [pad_ref[:, pad_max - pad + k * d: pad_max - pad + k * d + T]
             for k in range(kernel_size)],
            axis=0)                                   # (K*C, T) compute dtype
        y = jnp.dot(w_ref[...], slab,
                    preferred_element_type=jnp.float32)   # (C, T) f32

        # bias + residual add (f32).
        x = y + b_ref[...] + x

    # Final mask folded into the epilogue store.
    o_ref[0] = (x * mask).astype(o_ref.dtype)


def resblock2_forward(x, x_mask, w1_oik, b1, w2_oik, b2, dilations=(1, 3),
                      compute_dtype=jnp.bfloat16):
    """ResBlock2 forward.

    x      : (B, C, T)
    x_mask : (B, 1, T)
    w*_oik : (C_out, C_in, K)   effective (weight-normed) Conv1d weights
    b*     : (C,)               Conv1d bias
    """
    B, C, T = x.shape
    O, I, K = w1_oik.shape
    assert O == C and I == C
    assert K % 2 == 1, "'same' padding formula assumes an odd kernel size"

    pads = tuple(d * (K - 1) // 2 for d in dilations)
    pad_max = max(pads)

    # (O, I, K) -> (O, K*I): reduce-index order (k, i) matches the stacked slab.
    def _flatten_w(w):
        return jnp.transpose(w, (0, 2, 1)).reshape(O, K * I).astype(compute_dtype)

    w1f = _flatten_w(w1_oik)
    w2f = _flatten_w(w2_oik)
    b1c = b1.reshape(C, 1).astype(jnp.float32)
    b2c = b2.reshape(C, 1).astype(jnp.float32)

    kern = functools.partial(resblock2_kernel,
                             dilations=tuple(dilations),
                             kernel_size=K,
                             pad_max=pad_max)

    return pl.pallas_call(
        kern,
        out_shape=jax.ShapeDtypeStruct((B, C, T), x.dtype),
        grid_spec=pltpu.PrefetchScalarGridSpec(
            num_scalar_prefetch=0,
            grid=(B,),
            in_specs=[
                pl.BlockSpec((1, C, T), lambda b: (b, 0, 0)),     # x
                pl.BlockSpec((1, 1, T), lambda b: (b, 0, 0)),     # x_mask
                pl.BlockSpec((C, K * C), lambda b: (0, 0)),       # w1 (flattened)
                pl.BlockSpec((C, 1), lambda b: (0, 0)),           # b1
                pl.BlockSpec((C, K * C), lambda b: (0, 0)),       # w2 (flattened)
                pl.BlockSpec((C, 1), lambda b: (0, 0)),           # b2
            ],
            out_specs=pl.BlockSpec((1, C, T), lambda b: (b, 0, 0)),
            scratch_shapes=[pltpu.VMEM((C, T + 2 * pad_max), compute_dtype)],
        ),
        compiler_params=pltpu.CompilerParams(
            dimension_semantics=("parallel",),          # batch elems independent
            vmem_limit_bytes=64 * 1024 * 1024),
    )(x, x_mask, w1f, b1c, w2f, b2c)


# ----------------------------- pure-JAX reference -----------------------------
def _ref_conv1d(x, w_oik, b, d):
    pad = d * (w_oik.shape[2] - 1) // 2
    y = jax.lax.conv_general_dilated(
        x, w_oik, window_strides=(1,), padding=[(pad, pad)],
        rhs_dilation=(d,), dimension_numbers=("NCH", "OIH", "NCH"))
    return y + b[None, :, None]


def _ref_forward(x, mask, ws, bs, dils):
    for w, b, d in zip(ws, bs, dils):
        xt = jnp.where(x >= 0, x, LRELU_SLOPE * x) * mask
        x = _ref_conv1d(xt, w, b, d) + x
    return x * mask


if __name__ == "__main__":
    # Small but (8, 128)-aligned shapes -> lane-dense, unmasked vector stores.
    B, C, T, K = 2, 8, 128, 3
    dilations = (1, 3)

    key = jax.random.PRNGKey(0)
    kx, kv1, kv2, kb1, kb2 = jax.random.split(key, 5)

    x = jax.random.normal(kx, (B, C, T), dtype=jnp.float32)

    # Deterministic weight init mirroring ResBlock2.__init__:
    # init_weights -> v ~ N(0, 0.01); weight_norm: w = g * v / ||v||, g=||v|| at init.
    def make_weight(k):
        v = 0.01 * jax.random.normal(k, (C, C, K), dtype=jnp.float32)   # (O, I, K)
        norm = jnp.sqrt(jnp.sum(v * v, axis=(1, 2), keepdims=True))
        g = norm                                                        # weight_norm init
        return g * v / norm                                             # effective weight

    w1_oik = make_weight(kv1)
    w2_oik = make_weight(kv2)
    b1 = 0.01 * jax.random.normal(kb1, (C,), dtype=jnp.float32)
    b2 = 0.01 * jax.random.normal(kb2, (C,), dtype=jnp.float32)

    # Sequence mask (B, 1, T): 1 for valid frames, 0 for padding.
    lengths = jnp.array([T, T - 28], dtype=jnp.int32)
    x_mask = (jnp.arange(T)[None, None, :] < lengths[:, None, None]).astype(jnp.float32)

    ref = _ref_forward(x, x_mask, (w1_oik, w2_oik), (b1, b2), dilations)

    # 1) f32 compute path: bit-for-bit-ish check against the lax reference.
    out_f32 = resblock2_forward(x, x_mask, w1_oik, b1, w2_oik, b2, dilations,
                                compute_dtype=jnp.float32)
    out_f32 = jax.block_until_ready(out_f32)
    assert out_f32.shape == (B, C, T)
    assert jnp.allclose(out_f32, ref, atol=1e-5, rtol=1e-5), "f32 mismatch vs reference"

    # 2) Default bf16-matmul path (f32 accumulation): looser tolerance.
    out_bf16 = resblock2_forward(x, x_mask, w1_oik, b1, w2_oik, b2, dilations)
    out_bf16 = jax.block_until_ready(out_bf16)
    assert out_bf16.shape == (B, C, T)
    assert jnp.allclose(out_bf16, ref, atol=1e-2, rtol=1e-2), "bf16 mismatch vs reference"

    print("KERNEL_OK")
</pallas_src>

<mosaic_0001>
module attributes {stable_mosaic.version = 11 : i64} {
  func.func @resblock2_kernel(%arg0: i32, %arg1: memref<1x8x128xf32, #tpu.memory_space<vmem>>, %arg2: memref<1x1x128xf32, #tpu.memory_space<vmem>>, %arg3: memref<8x24xf32, #tpu.memory_space<vmem>>, %arg4: memref<8x1xf32, #tpu.memory_space<vmem>>, %arg5: memref<8x24xf32, #tpu.memory_space<vmem>>, %arg6: memref<8x1xf32, #tpu.memory_space<vmem>>, %arg7: memref<1x8x128xf32, #tpu.memory_space<vmem>>, %arg8: memref<8x134xf32, #tpu.memory_space<vmem>>) attributes {dimension_semantics = [#tpu.dimension_semantics<parallel>], iteration_bounds = array<i64: 2>, scalar_prefetch = 0 : i64, scratch_operands = 1 : i64, tpu.core_type = #tpu.core_type<tc>, window_params = [{transform_indices = @transform_0, window_bounds = array<i64: 1, 8, 128>}, {transform_indices = @transform_1, window_bounds = array<i64: 1, 1, 128>}, {pipeline_mode = #tpu.pipeline_mode<synchronous>, transform_indices = @transform_2, window_bounds = array<i64: 8, 24>}, {pipeline_mode = #tpu.pipeline_mode<synchronous>, transform_indices = @transform_3, window_bounds = array<i64: 8, 1>}, {pipeline_mode = #tpu.pipeline_mode<synchronous>, transform_indices = @transform_4, window_bounds = array<i64: 8, 24>}, {pipeline_mode = #tpu.pipeline_mode<synchronous>, transform_indices = @transform_5, window_bounds = array<i64: 8, 1>}, {transform_indices = @transform_6, window_bounds = array<i64: 1, 8, 128>}]} {
    %c0 = arith.constant 0 : index
    %c0_0 = arith.constant 0 : index
    %c0_1 = arith.constant 0 : index
    %0 = vector.load %arg1[%c0, %c0_0, %c0_1] : memref<1x8x128xf32, #tpu.memory_space<vmem>>, vector<1x8x128xf32>
    %1 = vector.shape_cast %0 : vector<1x8x128xf32> to vector<8x128xf32>
    %c0_2 = arith.constant 0 : index
    %c0_3 = arith.constant 0 : index
    %c0_4 = arith.constant 0 : index
    %2 = vector.load %arg2[%c0_2, %c0_3, %c0_4] : memref<1x1x128xf32, #tpu.memory_space<vmem>>, vector<1x1x128xf32>
    %3 = vector.shape_cast %2 : vector<1x1x128xf32> to vector<1x128xf32>
    %4 = vector.shape_cast %3 : vector<1x128xf32> to vector<1x128xf32>
    %5 = vector.broadcast %4 : vector<1x128xf32> to vector<8x128xf32>
    %cst = arith.constant 0.000000e+00 : f32
    %6 = vector.broadcast %cst : f32 to vector<8x134xf32>
    %c0_5 = arith.constant 0 : index
    %c0_6 = arith.constant 0 : index
    %7 = vector.load %arg8[%c0_5, %c0_6] : memref<8x134xf32, #tpu.memory_space<vmem>>, vector<8x134xf32>
    tpu.vector_store %arg8[%c0_5, %c0_6], %6 {strides = array<i32>} : memref<8x134xf32, #tpu.memory_space<vmem>>, vector<8x134xf32>,
    %cst_7 = arith.constant 0.000000e+00 : f32
    %8 = vector.broadcast %cst_7 : f32 to vector<8x128xf32>
    %9 = arith.cmpf oge, %1, %8 : vector<8x128xf32>
    %cst_8 = arith.constant 1.000000e-01 : f32
    %10 = vector.broadcast %cst_8 : f32 to vector<8x128xf32>
    %11 = arith.mulf %10, %1 : vector<8x128xf32>
    %12 = arith.select %9, %1, %11 : vector<8x128xi1>, vector<8x128xf32>
    %13 = arith.mulf %12, %5 : vector<8x128xf32>
    %c0_9 = arith.constant 0 : index
    %c3 = arith.constant 3 : index
    %14 = vector.load %arg8[%c0_9, %c3] : memref<8x134xf32, #tpu.memory_space<vmem>>, vector<8x128xf32>
    tpu.vector_store %arg8[%c0_9, %c3], %13 {strides = array<i32>} : memref<8x134xf32, #tpu.memory_space<vmem>>, vector<8x128xf32>,
    %c0_10 = arith.constant 0 : index
    %c2 = arith.constant 2 : index
    %15 = vector.load %arg8[%c0_10, %c2] : memref<8x134xf32, #tpu.memory_space<vmem>>, vector<8x128xf32>
    %c0_11 = arith.constant 0 : index
    %c3_12 = arith.constant 3 : index
    %16 = vector.load %arg8[%c0_11, %c3_12] : memref<8x134xf32, #tpu.memory_space<vmem>>, vector<8x128xf32>
    %c0_13 = arith.constant 0 : index
    %c4 = arith.constant 4 : index
    %17 = vector.load %arg8[%c0_13, %c4] : memref<8x134xf32, #tpu.memory_space<vmem>>, vector<8x128xf32>
    %18 = tpu.concatenate %15, %16, %17 in 0 : vector<8x128xf32>, vector<8x128xf32>, vector<8x128xf32> -> vector<24x128xf32>
    %c0_14 = arith.constant 0 : index
    %c0_15 = arith.constant 0 : index
    %19 = vector.load %arg3[%c0_14, %c0_15] : memref<8x24xf32, #tpu.memory_space<vmem>>, vector<8x24xf32>
    %cst_16 = arith.constant dense<0.000000e+00> : vector<8x128xf32>
    %20 = tpu.matmul %19, %18, %cst_16 {dimension_numbers = #tpu.dot_dimension_numbers<[1], [0], [0], [1], [0, 0, 1, 1], [], []>} : vector<8x24xf32>, vector<24x128xf32>, vector<8x128xf32> -> vector<8x128xf32>
    %c0_17 = arith.constant 0 : index
    %c0_18 = arith.constant 0 : index
    %21 = vector.load %arg4[%c0_17, %c0_18] : memref<8x1xf32, #tpu.memory_space<vmem>>, vector<8x1xf32>
    %22 = vector.broadcast %21 : vector<8x1xf32> to vector<8x128xf32>
    %23 = arith.addf %20, %22 : vector<8x128xf32>
    %24 = arith.addf %23, %1 : vector<8x128xf32>
    %cst_19 = arith.constant 0.000000e+00 : f32
    %25 = vector.broadcast %cst_19 : f32 to vector<8x128xf32>
    %26 = arith.cmpf oge, %24, %25 : vector<8x128xf32>
    %cst_20 = arith.constant 1.000000e-01 : f32
    %27 = vector.broadcast %cst_20 : f32 to vector<8x128xf32>
    %28 = arith.mulf %27, %24 : vector<8x128xf32>
    %29 = arith.select %26, %24, %28 : vector<8x128xi1>, vector<8x128xf32>
    %30 = arith.mulf %29, %5 : vector<8x128xf32>
    %c0_21 = arith.constant 0 : index
    %c3_22 = arith.constant 3 : index
    %31 = vector.load %arg8[%c0_21, %c3_22] : memref<8x134xf32, #tpu.memory_space<vmem>>, vector<8x128xf32>
    tpu.vector_store %arg8[%c0_21, %c3_22], %30 {strides = array<i32>} : memref<8x134xf32, #tpu.memory_space<vmem>>, vector<8x128xf32>,
    %c0_23 = arith.constant 0 : index
    %c0_24 = arith.constant 0 : index
    %32 = vector.load %arg8[%c0_23, %c0_24] : memref<8x134xf32, #tpu.memory_space<vmem>>, vector<8x128xf32>
    %c0_25 = arith.constant 0 : index
    %c3_26 = arith.constant 3 : index
    %33 = vector.load %arg8[%c0_25, %c3_26] : memref<8x134xf32, #tpu.memory_space<vmem>>, vector<8x128xf32>
    %c0_27 = arith.constant 0 : index
    %c6 = arith.constant 6 : index
    %34 = vector.load %arg8[%c0_27, %c6] : memref<8x134xf32, #tpu.memory_space<vmem>>, vector<8x128xf32>
    %35 = tpu.concatenate %32, %33, %34 in 0 : vector<8x128xf32>, vector<8x128xf32>, vector<8x128xf32> -> vector<24x128xf32>
    %c0_28 = arith.constant 0 : index
    %c0_29 = arith.constant 0 : index
    %36 = vector.load %arg5[%c0_28, %c0_29] : memref<8x24xf32, #tpu.memory_space<vmem>>, vector<8x24xf32>
    %cst_30 = arith.constant dense<0.000000e+00> : vector<8x128xf32>
    %37 = tpu.matmul %36, %35, %cst_30 {dimension_numbers = #tpu.dot_dimension_numbers<[1], [0], [0], [1], [0, 0, 1, 1], [], []>} : vector<8x24xf32>, vector<24x128xf32>, vector<8x128xf32> -> vector<8x128xf32>
    %c0_31 = arith.constant 0 : index
    %c0_32 = arith.constant 0 : index
    %38 = vector.load %arg6[%c0_31, %c0_32] : memref<8x1xf32, #tpu.memory_space<vmem>>, vector<8x1xf32>
    %39 = vector.broadcast %38 : vector<8x1xf32> to vector<8x128xf32>
    %40 = arith.addf %37, %39 : vector<8x128xf32>
    %41 = arith.addf %40, %24 : vector<8x128xf32>
    %42 = arith.mulf %41, %5 : vector<8x128xf32>
    %c0_33 = arith.constant 0 : index
    %c0_34 = arith.constant 0 : index
    %c0_35 = arith.constant 0 : index
    %43 = vector.load %arg7[%c0_33, %c0_34, %c0_35] : memref<1x8x128xf32, #tpu.memory_space<vmem>>, vector<1x8x128xf32>
    %44 = vector.shape_cast %43 : vector<1x8x128xf32> to vector<8x128xf32>
    %45 = vector.shape_cast %42 : vector<8x128xf32> to vector<1x8x128xf32>
    tpu.vector_store %arg7[%c0_33, %c0_34, %c0_35], %45 {strides = array<i32>} : memref<1x8x128xf32, #tpu.memory_space<vmem>>, vector<1x8x128xf32>,
    return
  }
  func.func @transform_0(%arg0: i32) -> (i32, i32, i32) {
    %c0_i32 = arith.constant 0 : i32
    %c0_i32_0 = arith.constant 0 : i32
    %c0_i32_1 = arith.constant 0 : i32
    return %arg0, %c0_i32, %c0_i32_0 : i32, i32, i32
  }
  func.func @transform_1(%arg0: i32) -> (i32, i32, i32) {
    %c0_i32 = arith.constant 0 : i32
    %c0_i32_0 = arith.constant 0 : i32
    %c0_i32_1 = arith.constant 0 : i32
    return %arg0, %c0_i32, %c0_i32_0 : i32, i32, i32
  }
  func.func @transform_2(%arg0: i32) -> (i32, i32) {
    %c0_i32 = arith.constant 0 : i32
    %c0_i32_0 = arith.constant 0 : i32
    %c0_i32_1 = arith.constant 0 : i32
    return %c0_i32, %c0_i32_0 : i32, i32
  }
  func.func @transform_3(%arg0: i32) -> (i32, i32) {
    %c0_i32 = arith.constant 0 : i32
    %c0_i32_0 = arith.constant 0 : i32
    %c0_i32_1 = arith.constant 0 : i32
    return %c0_i32, %c0_i32_0 : i32, i32
  }
  func.func @transform_4(%arg0: i32) -> (i32, i32) {
    %c0_i32 = arith.constant 0 : i32
    %c0_i32_0 = arith.constant 0 : i32
    %c0_i32_1 = arith.constant 0 : i32
    return %c0_i32, %c0_i32_0 : i32, i32
  }
  func.func @transform_5(%arg0: i32) -> (i32, i32) {
    %c0_i32 = arith.constant 0 : i32
    %c0_i32_0 = arith.constant 0 : i32
    %c0_i32_1 = arith.constant 0 : i32
    return %c0_i32, %c0_i32_0 : i32, i32
  }
  func.func @transform_6(%arg0: i32) -> (i32, i32, i32) {
    %c0_i32 = arith.constant 0 : i32
    %c0_i32_0 = arith.constant 0 : i32
    %c0_i32_1 = arith.constant 0 : i32
    return %arg0, %c0_i32, %c0_i32_0 : i32, i32, i32
  }
}

</mosaic_0001>

<llo_original>
// kernel: tpu_custom_call.1
$region0: #{tpu_custom_call.1}
  #allocation0 [shape = 'u32[]', space=smem, size = 0x4, offset = 0x4, fixed_abs, tag = 'smem constant byte address 0x4 - core index']
  #allocation1 [shape = 'u32[72,128]{1,0:T(1,128)}', space=vmem, size = 0x9000, scoped, tag = 'internal scratch']
  #allocation2 [shape = 'f32[8,134]{1,0:T(8,128)}', space=vmem, size = 0x2000, scoped, tag = 'scratch operand']
  %s0 = inlined_call_operand.vmem [shape: f32[2,8,128], index: 0, kind: input, shape index: {}]
  %s1 = inlined_call_operand.hbm [shape: f32[2,1,128], index: 1, kind: input, shape index: {}]
  %s2 = inlined_call_operand.hbm [shape: f32[8,24], index: 2, kind: input, shape index: {}]
  %s3 = inlined_call_operand.vmem [shape: f32[8,1], index: 3, kind: input, shape index: {}]
  %s4 = inlined_call_operand.hbm [shape: f32[8,24], index: 4, kind: input, shape index: {}]
  %s5 = inlined_call_operand.vmem [shape: f32[8,1], index: 5, kind: input, shape index: {}]
  %s6 = inlined_call_operand.hbm [shape: f32[2,8,128], index: 6, kind: output, shape index: {}]
  %s7 = sld [smem:[#allocation0]]
  $region69: #{tpu_custom_call.1} parent=0
    _
  %s9 = ssub.s32 1, %s7
  %s10 = scalar_select 0, %s9, %s7
  $region1: #{tpu_custom_call.1} parent=0
    #allocation3 [shape = 'u8[1024]{0}', space=vmem, size = 0x400, scoped, tag = 'input window, operand 1']
    #allocation4 [shape = 's32[2]{0}', space=sflag, size = 0x8, scoped, tag = 'scoped memory for tpu_custom_call.1']
    #allocation5 [shape = 's32[2]{0}', space=sflag, size = 0x8, scoped, tag = 'scoped memory for tpu_custom_call.1']
    #allocation6 [shape = 'u8[4096]{0}', space=vmem, size = 0x1000, scoped, tag = 'input window, operand 2, single buffered']
    #allocation7 [shape = 's32[1]{0}', space=sflag, size = 0x4, scoped, tag = 'scoped memory for tpu_custom_call.1']
    #allocation8 [shape = 'u8[4096]{0}', space=vmem, size = 0x1000, scoped, tag = 'input window, operand 4, single buffered']
    #allocation9 [shape = 'u8[8192]{0}', space=vmem, size = 0x2000, scoped, tag = 'output window, operand 0']
    %11 = vsyncpa [#allocation4], 0
    %s12 = scalar_lea.sflag [#allocation4], 1
    %13 = vsyncpa %s12, 0
    %14 = vsyncpa [#allocation7], 0
    %15 = vsyncpa [#allocation5], 0
    %s16 = scalar_lea.sflag [#allocation5], 1
    %17 = vsyncpa %s16, 0
    loop: start=0, step=1, limit=4
    $region2: #{tpu_custom_call.1} parent=1 // loop_pre_header
      _
    $region3: #{tpu_custom_call.1} parent=1 // loop_header
      %s19 = sphi 0, %s23
      %p20 = scmp.ge.s32.totalorder %s19, 4
      %s29 = sphi 0, %s31
      %s32 = sphi 0, %s29
      %s33 = sphi 0, %s32
      %s49 = sphi 0, %s33
      %s55 = sphi 0, %s57
      %s58 = sphi 0, %s55
      %s59 = sphi 0, %s58
      %s75 = sphi 0, %s59
      %s79 = sphi 0, %s79
      %s81 = sphi 0, %s79
      %s82 = sphi 0, %s81
      %s96 = sphi 0, %s82
      %s100 = sphi 0, %s100
      %s102 = sphi 0, %s100
      %s103 = sphi 0, %s102
      %s117 = sphi 0, %s103
      %s121 = sphi 0, %s121
      %s123 = sphi 0, %s121
      %s124 = sphi 0, %s123
      %s138 = sphi 0, %s124
      %s142 = sphi 0, %s142
      %s144 = sphi 0, %s142
      %s145 = sphi 0, %s144
      %s159 = sphi 0, %s145
      %s165 = sphi 0, %s167
      %s168 = sphi 0, %s165
      %s169 = sphi 0, %s168
      %s185 = sphi 0, %s169
    $region4: #{tpu_custom_call.1} parent=1 // loop_header_branch
      %22 = sbr.rel (%p20) target = $region8
    $region5: #{tpu_custom_call.1} parent=1 // loop_body
      %s24 = ssub.s32 %s19, 1
      %s25 = ssub.s32 %s19, 2
      %s26 = sadd.s32 %s19, 1
      %s27 = ssub.s32 %s19, %s26
      %p28 = scmp.eq.s32.totalorder %s27, 0
      %s30 = sadd.s32 %s29, 1
      %s31 = scalar_select %p28, %s29, %s30
      %p34 = pneg %p28
      %p35 = scmp.eq.s32.totalorder %s19, 1
      %p36 = por %p34, %p35
      %p37 = scmp.ne.s32.totalorder %s29, %s32
      %p38 = scmp.eq.s32.totalorder %s19, 0
      %p39 = por %p37, %p38
      %p40 = scmp.ne.s32.totalorder %s29, %s32
      %p41 = scmp.eq.s32.totalorder %s24, 1
      %p42 = por %p40, %p41
      %p43 = scmp.ne.s32.totalorder %s32, %s33
      %p44 = scmp.eq.s32.totalorder %s24, 0
      %p45 = por %p43, %p44
      %p46 = scmp.ne.s32.totalorder %s32, %s33
      %p47 = scmp.eq.s32.totalorder %s25, 1
      %p48 = por %p46, %p47
      %p50 = scmp.ne.s32.totalorder %s33, %s49
      %p51 = scmp.eq.s32.totalorder %s25, 0
      %p52 = por %p50, %p51
      %s53 = ssub.s32 %s19, %s26
      %p54 = scmp.eq.s32.totalorder %s53, 0
      %s56 = sadd.s32 %s55, 1
      %s57 = scalar_select %p54, %s55, %s56
      %p60 = pneg %p54
      %p61 = scmp.eq.s32.totalorder %s19, 1
      %p62 = por %p60, %p61
      %p63 = scmp.ne.s32.totalorder %s55, %s58
      %p64 = scmp.eq.s32.totalorder %s19, 0
      %p65 = por %p63, %p64
      %p66 = scmp.ne.s32.totalorder %s55, %s58
      %p67 = scmp.eq.s32.totalorder %s24, 1
      %p68 = por %p66, %p67
      %p69 = scmp.ne.s32.totalorder %s58, %s59
      %p70 = scmp.eq.s32.totalorder %s24, 0
      %p71 = por %p69, %p70
      %p72 = scmp.ne.s32.totalorder %s58, %s59
      %p73 = scmp.eq.s32.totalorder %s25, 1
      %p74 = por %p72, %p73
      %p76 = scmp.ne.s32.totalorder %s59, %s75
      %p77 = scmp.eq.s32.totalorder %s25, 0
      %p78 = por %p76, %p77
      %s80 = sadd.s32 %s79, 1
      %p83 = scmp.eq.s32.totalorder %s19, 1
      %p84 = scmp.ne.s32.totalorder %s79, %s81
      %p85 = scmp.eq.s32.totalorder %s19, 0
      %p86 = por %p84, %p85
      %p87 = scmp.ne.s32.totalorder %s79, %s81
      %p88 = scmp.eq.s32.totalorder %s24, 1
      %p89 = por %p87, %p88
      %p90 = scmp.ne.s32.totalorder %s81, %s82
      %p91 = scmp.eq.s32.totalorder %s24, 0
      %p92 = por %p90, %p91
      %p93 = scmp.ne.s32.totalorder %s81, %s82
      %p94 = scmp.eq.s32.totalorder %s25, 1
      %p95 = por %p93, %p94
      %p97 = scmp.ne.s32.totalorder %s82, %s96
      %p98 = scmp.eq.s32.totalorder %s25, 0
      %p99 = por %p97, %p98
      %s101 = sadd.s32 %s100, 1
      %p104 = scmp.eq.s32.totalorder %s19, 1
      %p105 = scmp.ne.s32.totalorder %s100, %s102
      %p106 = scmp.eq.s32.totalorder %s19, 0
      %p107 = por %p105, %p106
      %p108 = scmp.ne.s32.totalorder %s100, %s102
      %p109 = scmp.eq.s32.totalorder %s24, 1
      %p110 = por %p108, %p109
      %p111 = scmp.ne.s32.totalorder %s102, %s103
      %p112 = scmp.eq.s32.totalorder %s24, 0
      %p113 = por %p111, %p112
      %p114 = scmp.ne.s32.totalorder %s102, %s103
      %p115 = scmp.eq.s32.totalorder %s25, 1
      %p116 = por %p114, %p115
      %p118 = scmp.ne.s32.totalorder %s103, %s117
      %p119 = scmp.eq.s32.totalorder %s25, 0
      %p120 = por %p118, %p119
      %s122 = sadd.s32 %s121, 1
      %p125 = scmp.eq.s32.totalorder %s19, 1
      %p126 = scmp.ne.s32.totalorder %s121, %s123
      %p127 = scmp.eq.s32.totalorder %s19, 0
      %p128 = por %p126, %p127
      %p129 = scmp.ne.s32.totalorder %s121, %s123
      %p130 = scmp.eq.s32.totalorder %s24, 1
      %p131 = por %p129, %p130
      %p132 = scmp.ne.s32.totalorder %s123, %s124
      %p133 = scmp.eq.s32.totalorder %s24, 0
      %p134 = por %p132, %p133
      %p135 = scmp.ne.s32.totalorder %s123, %s124
      %p136 = scmp.eq.s32.totalorder %s25, 1
      %p137 = por %p135, %p136
      %p139 = scmp.ne.s32.totalorder %s124, %s138
      %p140 = scmp.eq.s32.totalorder %s25, 0
      %p141 = por %p139, %p140
      %s143 = sadd.s32 %s142, 1
      %p146 = scmp.eq.s32.totalorder %s19, 1
      %p147 = scmp.ne.s32.totalorder %s142, %s144
      %p148 = scmp.eq.s32.totalorder %s19, 0
      %p149 = por %p147, %p148
      %p150 = scmp.ne.s32.totalorder %s142, %s144
      %p151 = scmp.eq.s32.totalorder %s24, 1
      %p152 = por %p150, %p151
      %p153 = scmp.ne.s32.totalorder %s144, %s145
      %p154 = scmp.eq.s32.totalorder %s24, 0
      %p155 = por %p153, %p154
      %p156 = scmp.ne.s32.totalorder %s144, %s145
      %p157 = scmp.eq.s32.totalorder %s25, 1
      %p158 = por %p156, %p157
      %p160 = scmp.ne.s32.totalorder %s145, %s159
      %p161 = scmp.eq.s32.totalorder %s25, 0
      %p162 = por %p160, %p161
      %s163 = ssub.s32 %s19, %s26
      %p164 = scmp.eq.s32.totalorder %s163, 0
      %s166 = sadd.s32 %s165, 1
      %s167 = scalar_select %p164, %s165, %s166
      %p170 = pneg %p164
      %p171 = scmp.eq.s32.totalorder %s19, 1
      %p172 = por %p170, %p171
      %p173 = scmp.ne.s32.totalorder %s165, %s168
      %p174 = scmp.eq.s32.totalorder %s19, 0
      %p175 = por %p173, %p174
      %p176 = scmp.ne.s32.totalorder %s165, %s168
      %p177 = scmp.eq.s32.totalorder %s24, 1
      %p178 = por %p176, %p177
      %p179 = scmp.ne.s32.totalorder %s168, %s169
      %p180 = scmp.eq.s32.totalorder %s24, 0
      %p181 = por %p179, %p180
      %p182 = scmp.ne.s32.totalorder %s168, %s169
      %p183 = scmp.eq.s32.totalorder %s25, 1
      %p184 = por %p182, %p183
      %p186 = scmp.ne.s32.totalorder %s169, %s185
      %p187 = scmp.eq.s32.totalorder %s25, 0
      %p188 = por %p186, %p187
      %p189 = scmp.le.s32.totalorder 1, %s19
      %p190 = scmp.lt.s32.totalorder %s19, 3
      %p191 = pnand %p189, %p190
      %p192 = pneg %p191
      // Predicated region
      $region9: #{tpu_custom_call.1} parent=5 // pred_check
        _
      $region10: #{tpu_custom_call.1} parent=5 // pred_check_branch
        %194 = sbr.rel (%p191) target = $region12
      $region11: #{tpu_custom_call.1} parent=5 // pred_region
        %s195 = ssub.s32 %s19, 1
        // Predicated region
        $region13: #{tpu_custom_call.1} parent=11 // pred_check
          %p196 = pneg %p92
        $region14: #{tpu_custom_call.1} parent=11 // pred_check_branch
          %198 = sbr.rel (%p196) target = $region16
        $region15: #{tpu_custom_call.1} parent=11 // pred_region
          %200 = vsyncadd [#allocation7], 0
          %s202 = sshll.u32 %s2, 4
          %s203 = int_to_ptr.hbm [resolvable:$true] %s202
          %s204 = sshll.u32 [#allocation6], 4
          %s205 = int_to_ptr.vmem [resolvable:$true] %s204
          %207 = dma.hbm_to_vmem [thread:$0]  %s203, 128, %s205, [#allocation7]
        $region16: #{tpu_custom_call.1} parent=11 // pred_fallthru
          _
        // Predicated region
        $region17: #{tpu_custom_call.1} parent=11 // pred_check
          %p208 = pneg %p113
        $region18: #{tpu_custom_call.1} parent=11 // pred_check_branch
          %210 = sbr.rel (%p208) target = $region20
        $region19: #{tpu_custom_call.1} parent=11 // pred_region
          _
        $region20: #{tpu_custom_call.1} parent=11 // pred_fallthru
          _
        // Predicated region
        $region21: #{tpu_custom_call.1} parent=11 // pred_check
          %p211 = pneg %p134
        $region22: #{tpu_custom_call.1} parent=11 // pred_check_branch
          %213 = sbr.rel (%p211) target = $region24
        $region23: #{tpu_custom_call.1} parent=11 // pred_region
          %215 = vsyncadd [#allocation7], 0
          %s217 = sshll.u32 %s4, 4
          %s218 = int_to_ptr.hbm [resolvable:$true] %s217
          %s219 = sshll.u32 [#allocation8], 4
          %s220 = int_to_ptr.vmem [resolvable:$true] %s219
          %222 = dma.hbm_to_vmem [thread:$0]  %s218, 128, %s220, [#allocation7]
        $region24: #{tpu_custom_call.1} parent=11 // pred_fallthru
          _
        // Predicated region
        $region25: #{tpu_custom_call.1} parent=11 // pred_check
          %p223 = pneg %p155
        $region26: #{tpu_custom_call.1} parent=11 // pred_check_branch
          %225 = sbr.rel (%p223) target = $region28
        $region27: #{tpu_custom_call.1} parent=11 // pred_region
          _
        $region28: #{tpu_custom_call.1} parent=11 // pred_fallthru
          _
      $region12: #{tpu_custom_call.1} parent=5 // pred_fallthru
        _
      %p226 = scmp.lt.s32.totalorder %s19, 2
      // Predicated region
      $region29: #{tpu_custom_call.1} parent=5 // pred_check
        %p227 = pneg %p226
      $region30: #{tpu_custom_call.1} parent=5 // pred_check_branch
        %229 = sbr.rel (%p227) target = $region32
      $region31: #{tpu_custom_call.1} parent=5 // pred_region
        // Predicated region
        $region33: #{tpu_custom_call.1} parent=31 // pred_check
          %p230 = pneg %p39
        $region34: #{tpu_custom_call.1} parent=31 // pred_check_branch
          %232 = sbr.rel (%p230) target = $region36
        $region35: #{tpu_custom_call.1} parent=31 // pred_region
          %p233 = scmp.lt.s32.totalorder %s19, 1
          %s234 = scalar_select %p233, %s19, 1
          %s235 = smul.addr %s234, 8
          %s236 = scalar_lea.vmem %s0, %s235
        $region36: #{tpu_custom_call.1} parent=31 // pred_fallthru
          _
        // Predicated region
        $region37: #{tpu_custom_call.1} parent=31 // pred_check
          %p237 = pneg %p65
        $region38: #{tpu_custom_call.1} parent=31 // pred_check_branch
          %239 = sbr.rel (%p237) target = $region40
        $region39: #{tpu_custom_call.1} parent=31 // pred_region
          %s240 = sand.u32 %s55, 1
          %s241 = scalar_lea.sflag [#allocation4], %s240
          %s242 = sand.u32 %s55, 1
          %s243 = scalar_lea.vmem [#allocation3], %s242
          %245 = vsyncadd %s241, 0
          %s246 = scalar_lea.hbm %s1, %s19
          %s248 = sshll.u32 %s246, 4
          %s249 = int_to_ptr.hbm [resolvable:$true] %s248
          %s250 = sshll.u32 %s243, 4
          %s251 = int_to_ptr.vmem [resolvable:$true] %s250
          %253 = dma.hbm_to_vmem [thread:$0]  %s249, 16, %s251, %s241
        $region40: #{tpu_custom_call.1} parent=31 // pred_fallthru
          _
      $region32: #{tpu_custom_call.1} parent=5 // pred_fallthru
        _
      %p254 = scmp.le.s32.totalorder 1, %s19
      %p255 = scmp.lt.s32.totalorder %s19, 3
      %p256 = pnand %p254, %p255
      %p257 = pneg %p256
      // Predicated region
      $region41: #{tpu_custom_call.1} parent=5 // pred_check
        _
      $region42: #{tpu_custom_call.1} parent=5 // pred_check_branch
        %259 = sbr.rel (%p256) target = $region44
      $region43: #{tpu_custom_call.1} parent=5 // pred_region
        %s260 = ssub.s32 %s19, 1
        %s261 = sand.u32 %s58, 1
        %s262 = scalar_lea.sflag [#allocation4], %s261
        %s263 = sand.u32 %s58, 1
        %s264 = scalar_lea.vmem [#allocation3], %s263
        // Predicated region
        $region45: #{tpu_custom_call.1} parent=43 // pred_check
          %p265 = pneg %p71
        $region46: #{tpu_custom_call.1} parent=43 // pred_check_branch
          %267 = sbr.rel (%p265) target = $region48
        $region47: #{tpu_custom_call.1} parent=43 // pred_region
          %269 = dma.done %s262, 16
        $region48: #{tpu_custom_call.1} parent=43 // pred_fallthru
          _
        // Predicated region
        $region49: #{tpu_custom_call.1} parent=43 // pred_check
          %p270 = pneg %p92
        $region50: #{tpu_custom_call.1} parent=43 // pred_check_branch
          %272 = sbr.rel (%p270) target = $region52
        $region51: #{tpu_custom_call.1} parent=43 // pred_region
          %274 = dma.done [#allocation7], 128
        $region52: #{tpu_custom_call.1} parent=43 // pred_fallthru
          _
        // Predicated region
        $region53: #{tpu_custom_call.1} parent=43 // pred_check
          %p275 = pneg %p134
        $region54: #{tpu_custom_call.1} parent=43 // pred_check_branch
          %277 = sbr.rel (%p275) target = $region56
        $region55: #{tpu_custom_call.1} parent=43 // pred_region
          %279 = dma.done [#allocation7], 128
        $region56: #{tpu_custom_call.1} parent=43 // pred_fallthru
          _
        %p280 = scmp.lt.s32.totalorder %s24, 1
        %s281 = scalar_select %p280, %s24, 1
        %s282 = smul.addr %s281, 8
        %s283 = scalar_lea.vmem %s0, %s282
        %p284 = pneg %p45
        %p285 = pneg %p42
        %s286 = sand.u32 %s58, 1
        %s287 = scalar_lea.sflag [#allocation4], %s286
        %s288 = sand.u32 %s58, 1
        %s289 = scalar_lea.vmem [#allocation3], %s288
        %p290 = pneg %p71
        %p291 = pneg %p68
        %p292 = pneg %p92
        %p293 = pneg %p89
        %p294 = pneg %p113
        %p295 = pneg %p110
        %p296 = pneg %p134
        %p297 = pneg %p131
        %p298 = pneg %p155
        %p299 = pneg %p152
        %p300 = pneg %p181
        %p301 = pneg %p178
        %s302 = sand.u32 %s168, 1
        %s303 = scalar_lea.sflag [#allocation5], %s302
        %s304 = sand.u32 %s168, 1
        %s305 = smul.addr %s304, 8
        %s306 = scalar_lea.vmem [#allocation9], %s305
        %p307 = scmp.lt.s32.totalorder %s24, 1
        %s308 = scalar_select %p307, %s24, 1
        %s309 = smul.addr %s308, 8
        %s310 = scalar_lea.vmem %s0, %s309
        %v311 = vld [vmem:[%s310] sm:$0xff]
        %v312 = vld [vmem:[%s264] sm:$0x1]
        %v314 = vperm.slane %v312, 0
        %316 = vst [vmem:[#allocation2] sm:$0xff] 0.0
        %vm317 = vcmask 48128
        %318 = vst.msk [vmem:[#allocation2 + $0x8] sm:$0xff] %vm317, 0.0
        %vm319 = vcmp.ge.f32.partialorder %v311, 0.0
        %v320 = vmul.f32 %v311, 0.1
        %v321 = vsel %vm319, %v311, %v320
        %v322 = vmul.f32 %v321, %v314
        %324 = vrot.lane.b32.xlu0 %v322, 3
        %v325 = vpop.permute.xlu0 %324
        %vm327 = vcmask 1047576
        %328 = vst.msk [vmem:[#allocation2] sm:$0xff] %vm327, %v325
        %vm329 = vcmask 23552
        %330 = vst.msk [vmem:[#allocation2 + $0x8] sm:$0xff] %vm329, %v325
        %v331 = vld [vmem:[#allocation2] sm:$0xff]
        %v332 = vld [vmem:[#allocation2 + $0x8] sm:$0xff]
        %335 = vrot.lane.b32.xlu0 %v331, 127
        %v336 = vpop.permute.xlu0 %335
        %337 = vrot.lane.b32.xlu0 %v332, 127
        %v338 = vpop.permute.xlu0 %337
        %vm339 = vcmask 1039360
        %v340 = vsel %vm339, %v336, %v338
        %341 = vrot.lane.b32.xlu0 %v331, 126
        %v342 = vpop.permute.xlu0 %341
        %343 = vrot.lane.b32.xlu0 %v332, 126
        %v344 = vpop.permute.xlu0 %343
        %vm345 = vcmask 1031168
        %v346 = vsel %vm345, %v342, %v344
        %v347 = vld [vmem:[#allocation6] sm:$0xff]
        %v348 = vld [vmem:[%s3] sm:$0xff]
        %350 = vset.pattern.permute.xlu0 0
        %351 = vperm.xlu0 %350, %v348
        %v352 = vpop.permute.xlu0 %351
        %354 = vrot.lane.b32.xlu0 %v340, 126
        %v355 = vpop.permute.xlu0 %354
        %356 = vrot.lane.b32.xlu0 %v338, 126
        %v357 = vpop.permute.xlu0 %356
        %358 = vrot.lane.b32.xlu0 %v346, 126
        %v359 = vpop.permute.xlu0 %358
        %360 = vrot.lane.b32.xlu0 %v344, 126
        %v361 = vpop.permute.xlu0 %360
        %v362 = vsel %vm345, %v355, %v357
        %v363 = vsel %vm345, %v359, %v361
        %vm367 = vcmask 195584
        %v369 = vsel %vm367, %v347, 0
        %371 = vmatpush.msra.mxu0 0.0
        %372 = vmatpush.msra.mxu0 0.0
        %373 = vmatpush.msra.mxu0 0.0
        %374 = vmatpush.msra.mxu0 0.0
        %375 = vmatpush.msra.mxu0 0.0
        %376 = vmatpush.msra.mxu0 0.0
        %377 = vmatpush.msra.mxu0 0.0
        %378 = vmatpush.msra.mxu0 0.0
        %379 = vmatpush.msra.mxu0 0.0
        %380 = vmatpush.msra.mxu0 0.0
        %381 = vmatpush.msra.mxu0 0.0
        %382 = vmatpush.msra.mxu0 0.0
        %383 = vmatpush.msra.mxu0 0.0
        %384 = vmatpush.msra.mxu0 %v363
        %385 = vmatpush.msra.mxu0 %v362
        %386 = vmatpush.msra.mxu0 %v346
        %387 = vmatmul.f32.gmra.mxu0 %v369
        %v388 = vpop.f32.mrf.mxu0
        %v389 = vadd.f32 %v352, %v388
        %390 = vdwg.mxu0
        %v391 = vadd.f32 %v389, %v311
        %vm392 = vcmp.ge.f32.partialorder %v391, 0.0
        %v393 = vmul.f32 %v391, 0.1
        %v394 = vsel %vm392, %v391, %v393
        %v395 = vmul.f32 %v394, %v314
        %397 = vrot.lane.b32.xlu0 %v395, 3
        %v398 = vpop.permute.xlu0 %397
        %400 = vst.msk [vmem:[#allocation2] sm:$0xff] %vm327, %v398
        %401 = vst.msk [vmem:[#allocation2 + $0x8] sm:$0xff] %vm329, %v398
        %v402 = vld [vmem:[#allocation2] sm:$0xff]
        %v403 = vld [vmem:[#allocation2 + $0x8] sm:$0xff]
        %406 = vrot.lane.b32.xlu0 %v402, 125
        %v407 = vpop.permute.xlu0 %406
        %408 = vrot.lane.b32.xlu0 %v403, 125
        %v409 = vpop.permute.xlu0 %408
        %vm410 = vcmask 1022976
        %v411 = vsel %vm410, %v407, %v409
        %413 = vrot.lane.b32.xlu0 %v402, 122
        %v414 = vpop.permute.xlu0 %413
        %415 = vrot.lane.b32.xlu0 %v403, 122
        %v416 = vpop.permute.xlu0 %415
        %vm417 = vcmask 998400
        %v418 = vsel %vm417, %v414, %v416
        %v420 = vld [vmem:[#allocation8] sm:$0xff]
        %v421 = vld [vmem:[%s5] sm:$0xff]
        %423 = vset.pattern.permute.xlu0 0
        %424 = vperm.xlu0 %423, %v421
        %v425 = vpop.permute.xlu0 %424
        %v428 = vsel %vm367, %v420, 0
        %430 = vmatpush.msra.mxu0 0.0
        %431 = vmatpush.msra.mxu0 0.0
        %432 = vmatpush.msra.mxu0 0.0
        %433 = vmatpush.msra.mxu0 0.0
        %434 = vmatpush.msra.mxu0 0.0
        %435 = vmatpush.msra.mxu0 0.0
        %436 = vmatpush.msra.mxu0 0.0
        %437 = vmatpush.msra.mxu0 0.0
        %438 = vmatpush.msra.mxu0 0.0
        %439 = vmatpush.msra.mxu0 0.0
        %440 = vmatpush.msra.mxu0 0.0
        %441 = vmatpush.msra.mxu0 0.0
        %442 = vmatpush.msra.mxu0 0.0
        %443 = vmatpush.msra.mxu0 %v418
        %444 = vmatpush.msra.mxu0 %v411
        %445 = vmatpush.msra.mxu0 %v402
        %446 = vmatmul.f32.gmra.mxu0 %v428
        %v447 = vpop.f32.mrf.mxu0
        %v448 = vadd.f32 %v425, %v447
        %449 = vdwg.mxu0
        %v450 = vadd.f32 %v448, %v391
        %v451 = vmul.f32 %v450, %v314
        %452 = vst [vmem:[%s306] sm:$0xff] %v451
        %s453 = sand.u32 %s168, 1
        %s454 = scalar_lea.sflag [#allocation5], %s453
        %s455 = sand.u32 %s168, 1
        %s456 = smul.addr %s455, 8
        %s457 = scalar_lea.vmem [#allocation9], %s456
        // Predicated region
        $region57: #{tpu_custom_call.1} parent=43 // pred_check
          %p458 = pneg %p178
        $region58: #{tpu_custom_call.1} parent=43 // pred_check_branch
          %460 = sbr.rel (%p458) target = $region60
        $region59: #{tpu_custom_call.1} parent=43 // pred_region
          %462 = vsyncadd %s454, 0
          %s463 = smul.addr %s24, 8
          %s464 = scalar_lea.hbm %s6, %s463
          %s466 = sshll.u32 %s457, 4
          %s467 = int_to_ptr.vmem [resolvable:$true] %s466
          %s468 = sshll.u32 %s464, 4
          %s469 = int_to_ptr.hbm [resolvable:$true] %s468
          %471 = dma.vmem_to_hbm [thread:$0]  %s467, 128, %s469, %s454
        $region60: #{tpu_custom_call.1} parent=43 // pred_fallthru
          _
      $region44: #{tpu_custom_call.1} parent=5 // pred_fallthru
        _
      %p472 = scmp.le.s32.totalorder 2, %s19
      // Predicated region
      $region61: #{tpu_custom_call.1} parent=5 // pred_check
        %p473 = pneg %p472
      $region62: #{tpu_custom_call.1} parent=5 // pred_check_branch
        %475 = sbr.rel (%p473) target = $region64
      $region63: #{tpu_custom_call.1} parent=5 // pred_region
        %s476 = ssub.s32 %s19, 2
        // Predicated region
        $region65: #{tpu_custom_call.1} parent=63 // pred_check
          %p477 = pneg %p184
        $region66: #{tpu_custom_call.1} parent=63 // pred_check_branch
          %479 = sbr.rel (%p477) target = $region68
        $region67: #{tpu_custom_call.1} parent=63 // pred_region
          %s480 = sand.u32 %s169, 1
          %s481 = scalar_lea.sflag [#allocation5], %s480
          %s482 = sand.u32 %s169, 1
          %s483 = smul.addr %s482, 8
          %s484 = scalar_lea.vmem [#allocation9], %s483
          %486 = dma.done %s481, 128
        $region68: #{tpu_custom_call.1} parent=63 // pred_fallthru
          _
      $region64: #{tpu_custom_call.1} parent=5 // pred_fallthru
        _
    $region6: #{tpu_custom_call.1} parent=1 // loop_footer
      %s23 = sadd.s32 1, %s19
    $region7: #{tpu_custom_call.1} parent=1 // loop_footer_branch
      %18 = sbr.rel target = $region3
    $region8: #{tpu_custom_call.1} parent=1 // loop_exit
      _
    %487 = vsyncpa [#allocation4], 1
    %s488 = scalar_lea.sflag [#allocation4], 1
    %489 = vsyncpa %s488, 1
    %490 = vsyncpa [#allocation7], 1
    %491 = vsyncpa [#allocation5], 1
    %s492 = scalar_lea.sflag [#allocation5], 1
    %493 = vsyncpa %s492, 1

</llo_original>
